<compile_context>
chip_gen: v5e
topology: v5e:2x2
jax: 0.10.0
libtpu: 0.0.40
codegen_flags: <defaults>
</compile_context>

<pallas_src>
import functools

import jax
import jax.numpy as jnp
from jax.experimental import pallas as pl
from jax.experimental.pallas import tpu as pltpu


def _entropy_kernel(x_ref, o_ref, *, n_rows, block_rows):
    """Accumulate -sum(p * log p) with softmax over the last axis of x_ref.

    x_ref: (block_rows, C) tile of logits.
    o_ref: (1, 1) f32 running total (same output block for every grid step).
    """
    i = pl.program_id(0)

    @pl.when(i == 0)
    def _():
        o_ref[...] = jnp.zeros_like(o_ref)

    x = x_ref[...].astype(jnp.float32)                      # (tr, C)
    tr = x.shape[0]

    # Mask rows past the true extent (the last grid step may overhang R).
    row_ids = i * block_rows + jax.lax.broadcasted_iota(jnp.int32, (tr, 1), 0)
    valid = row_ids < n_rows
    x = jnp.where(valid, x, 0.0)                            # keep padded rows finite

    # Numerically stable softmax / log-softmax over the last axis:
    #   z = x - max(x); e = exp(z); s = sum(e)
    #   -sum_j p_j log p_j = log(s) - sum_j e_j * z_j / s
    m = jnp.max(x, axis=-1, keepdims=True)
    z = x - m
    e = jnp.exp(z)
    s = jnp.sum(e, axis=-1, keepdims=True)
    row_ent = jnp.log(s) - jnp.sum(e * z, axis=-1, keepdims=True) / s
    row_ent = jnp.where(valid, row_ent, 0.0)

    o_ref[...] = o_ref[...] + jnp.sum(row_ent)


def _entropy_rows(x2d):
    """Total entropy of a (rows, classes) slab, softmax over the last axis."""
    R, C = x2d.shape
    itemsize = jnp.dtype(x2d.dtype).itemsize

    # Row tile: multiple of 8 sublanes, ~2 MiB per input block.  Big enough to
    # amortize the ~0.35 us per-grid-step overhead, small enough that the
    # double-buffered input blocks fit comfortably in scoped VMEM on
    # v5e (16 MiB default) / v6e (32 MiB) / v7x (32 MiB of 64 MiB physical).
    rows_cap = max(8, ((2 * 1024 * 1024) // max(1, C * itemsize)) // 8 * 8)
    if R <= rows_cap:
        tr = R                  # single block: full-extent dims are always legal
    else:
        tr = rows_cap           # multiple of 8; ragged tail handled by masking
    grid = (pl.cdiv(R, tr),)

    kernel = functools.partial(_entropy_kernel, n_rows=R, block_rows=tr)
    out = pl.pallas_call(
        kernel,
        out_shape=jax.ShapeDtypeStruct((1, 1), jnp.float32),
        grid_spec=pltpu.PrefetchScalarGridSpec(
            num_scalar_prefetch=0,
            grid=grid,
            in_specs=[pl.BlockSpec((tr, C), lambda i: (i, 0))],
            out_specs=pl.BlockSpec((1, 1), lambda i: (0, 0)),
        ),
        compiler_params=pltpu.CompilerParams(
            # Single reduction axis accumulating into a shared output block.
            dimension_semantics=("arbitrary",),
        ),
    )(x2d)
    return out[0, 0]


class Entropy:
    """JAX/Pallas equivalent of the PyTorch Entropy module."""

    def __call__(self, x):
        assert x.ndim >= 2, "Entropy expects logits with a class axis at dim=1"
        if x.ndim == 2:
            rows = x  # (N, C): already rows x classes, no data movement needed
        else:
            # Move the class axis (dim=1) last and flatten the rest into rows.
            # TODO(synk): for ND inputs this transpose happens in XLA outside the
            # kernel; a strided in-kernel reduction could avoid the extra HBM pass.
            rows = jnp.moveaxis(x, 1, -1).reshape(-1, x.shape[1])
        return _entropy_rows(rows)


if __name__ == "__main__":
    key = jax.random.PRNGKey(0)
    k1, k2 = jax.random.split(key)
    ent = Entropy()

    # 2-D logits: batch=16, classes=128.
    x1 = jax.random.normal(k1, (16, 128), dtype=jnp.float32)
    y1 = jax.block_until_ready(ent(x1))
    ref1 = -jnp.sum(jax.nn.softmax(x1, axis=1) * jax.nn.log_softmax(x1, axis=1))
    assert y1.shape == ()
    assert y1.dtype == jnp.float32
    assert jnp.allclose(y1, ref1, rtol=1e-4, atol=1e-3), (y1, ref1)

    # 4-D logits (N, C, H, W): softmax over channels, like torch dim=1.
    x2 = jax.random.normal(k2, (2, 4, 16, 16), dtype=jnp.float32)
    y2 = jax.block_until_ready(ent(x2))
    ref2 = -jnp.sum(jax.nn.softmax(x2, axis=1) * jax.nn.log_softmax(x2, axis=1))
    assert jnp.allclose(y2, ref2, rtol=1e-4, atol=1e-3), (y2, ref2)

    print("KERNEL_OK")
</pallas_src>

<mosaic_0001>
module attributes {stable_mosaic.version = 11 : i64} {
  func.func @_entropy_kernel(%arg0: i32, %arg1: memref<16x128xf32, #tpu.memory_space<vmem>>, %arg2: memref<1x1xf32, #tpu.memory_space<vmem>>) attributes {dimension_semantics = [#tpu.dimension_semantics<arbitrary>], iteration_bounds = array<i64: 1>, scalar_prefetch = 0 : i64, scratch_operands = 0 : i64, tpu.core_type = #tpu.core_type<tc>, window_params = [{transform_indices = @transform_0, window_bounds = array<i64: 16, 128>}, {pipeline_mode = #tpu.pipeline_mode<synchronous>, transform_indices = @transform_1, window_bounds = array<i64: 1, 1>}]} {
    %c0_i32 = arith.constant 0 : i32
    %0 = arith.cmpi eq, %arg0, %c0_i32 : i32
    %1 = arith.extui %0 : i1 to i32
    %c0_i32_0 = arith.constant 0 : i32
    %2 = arith.cmpi ne, %1, %c0_i32_0 : i32
    scf.if %2 {
      %cst_12 = arith.constant 0.000000e+00 : f32
      %37 = vector.broadcast %cst_12 : f32 to vector<1x1xf32>
      %c0_13 = arith.constant 0 : index
      %c0_14 = arith.constant 0 : index
      %38 = vector.load %arg2[%c0_13, %c0_14] : memref<1x1xf32, #tpu.memory_space<vmem>>, vector<1x1xf32>
      tpu.vector_store %arg2[%c0_13, %c0_14], %37 {strides = array<i32>} : memref<1x1xf32, #tpu.memory_space<vmem>>, vector<1x1xf32>,
    } else {
    }
    %c0 = arith.constant 0 : index
    %c0_1 = arith.constant 0 : index
    %3 = vector.load %arg1[%c0, %c0_1] : memref<16x128xf32, #tpu.memory_space<vmem>>, vector<16x128xf32>
    %c16_i32 = arith.constant 16 : i32
    %4 = arith.muli %arg0, %c16_i32 : i32
    %5 = tpu.iota {dimensions = array<i32: 0>} : vector<16x1xi32>
    %6 = vector.broadcast %4 : i32 to vector<16x1xi32>
    %7 = arith.addi %6, %5 : vector<16x1xi32>
    %c16_i32_2 = arith.constant 16 : i32
    %8 = vector.broadcast %c16_i32_2 : i32 to vector<16x1xi32>
    %9 = arith.cmpi slt, %7, %8 : vector<16x1xi32>
    %cst = arith.constant 0.000000e+00 : f32
    %10 = vector.shape_cast %9 : vector<16x1xi1> to vector<16x1xi1>
    %11 = vector.broadcast %10 : vector<16x1xi1> to vector<16x128xi1>
    %12 = vector.broadcast %cst : f32 to vector<16x128xf32>
    %13 = arith.select %11, %3, %12 : vector<16x128xi1>, vector<16x128xf32>
    %cst_3 = arith.constant dense<0xFF800000> : vector<16xf32>
    %14 = vector.multi_reduction <maximumf>, %13, %cst_3 [1] : vector<16x128xf32> to vector<16xf32>
    %15 = vector.shape_cast %14 : vector<16xf32> to vector<16x1xf32>
    %16 = vector.broadcast %15 : vector<16x1xf32> to vector<16x128xf32>
    %17 = arith.subf %13, %16 : vector<16x128xf32>
    %18 = math.exp %17 : vector<16x128xf32>
    %cst_4 = arith.constant dense<0.000000e+00> : vector<16xf32>
    %19 = vector.multi_reduction <add>, %18, %cst_4 [1] : vector<16x128xf32> to vector<16xf32>
    %20 = vector.shape_cast %19 : vector<16xf32> to vector<16x1xf32>
    %21 = math.log %20 : vector<16x1xf32>
    %22 = arith.mulf %18, %17 : vector<16x128xf32>
    %cst_5 = arith.constant dense<0.000000e+00> : vector<16xf32>
    %23 = vector.multi_reduction <add>, %22, %cst_5 [1] : vector<16x128xf32> to vector<16xf32>
    %24 = vector.shape_cast %23 : vector<16xf32> to vector<16x1xf32>
    %25 = arith.divf %24, %20 : vector<16x1xf32>
    %26 = arith.subf %21, %25 : vector<16x1xf32>
    %cst_6 = arith.constant 0.000000e+00 : f32
    %27 = vector.broadcast %cst_6 : f32 to vector<16x1xf32>
    %28 = arith.select %9, %26, %27 : vector<16x1xi1>, vector<16x1xf32>
    %c0_7 = arith.constant 0 : index
    %c0_8 = arith.constant 0 : index
    %29 = vector.load %arg2[%c0_7, %c0_8] : memref<1x1xf32, #tpu.memory_space<vmem>>, vector<1x1xf32>
    %30 = vector.shape_cast %28 : vector<16x1xf32> to vector<1x16x1xf32>
    %cst_9 = arith.constant dense<0.000000e+00> : vector<1xf32>
    %31 = vector.multi_reduction <add>, %30, %cst_9 [1, 2] : vector<1x16x1xf32> to vector<1xf32>
    %32 = vector.shape_cast %31 : vector<1xf32> to vector<1x1x1xf32>
    %33 = vector.extract %32[0, 0, 0] : f32 from vector<1x1x1xf32>
    %34 = vector.broadcast %33 : f32 to vector<1x1xf32>
    %35 = arith.addf %29, %34 : vector<1x1xf32>
    %c0_10 = arith.constant 0 : index
    %c0_11 = arith.constant 0 : index
    %36 = vector.load %arg2[%c0_10, %c0_11] : memref<1x1xf32, #tpu.memory_space<vmem>>, vector<1x1xf32>
    tpu.vector_store %arg2[%c0_10, %c0_11], %35 {strides = array<i32>} : memref<1x1xf32, #tpu.memory_space<vmem>>, vector<1x1xf32>,
    return
  }
  func.func @transform_0(%arg0: i32) -> (i32, i32) {
    %c0_i32 = arith.constant 0 : i32
    %c0_i32_0 = arith.constant 0 : i32
    return %arg0, %c0_i32 : i32, i32
  }
  func.func @transform_1(%arg0: i32) -> (i32, i32) {
    %c0_i32 = arith.constant 0 : i32
    %c0_i32_0 = arith.constant 0 : i32
    %c0_i32_1 = arith.constant 0 : i32
    return %c0_i32, %c0_i32_0 : i32, i32
  }
}

</mosaic_0001>

<llo_original>
// kernel: tpu_custom_call.1
$region0: #{tpu_custom_call.1}
  #allocation0 [shape = 'u32[]', space=smem, size = 0x4, offset = 0x4, fixed_abs, tag = 'smem constant byte address 0x4 - core index']
  #allocation1 [shape = 'u32[72,128]{1,0:T(1,128)}', space=vmem, size = 0x9000, scoped, tag = 'internal scratch']
  %s0 = inlined_call_operand.hbm [shape: f32[16,128], index: 0, kind: input, shape index: {}]
  %s1 = inlined_call_operand.hbm [shape: f32[1,1], index: 1, kind: output, shape index: {}]
  %s2 = sld [smem:[#allocation0]]
  $region22: #{tpu_custom_call.1} parent=0
    _
  %s4 = ssub.s32 1, %s2
  %s5 = scalar_select 0, %s4, %s2
  $region1: #{tpu_custom_call.1} parent=0
    #allocation2 [shape = 'u8[8192]{0}', space=vmem, size = 0x2000, scoped, tag = 'input window, operand 0, single buffered']
    #allocation3 [shape = 's32[1]{0}', space=sflag, size = 0x4, scoped, tag = 'scoped memory for tpu_custom_call.1']
    #allocation4 [shape = 's32[1]{0}', space=sflag, size = 0x4, scoped, tag = 'scoped memory for tpu_custom_call.1']
    #allocation5 [shape = 'u8[512]{0}', space=vmem, size = 0x400, scoped, tag = 'output window, operand 0, single buffered']
    %6 = vsyncpa [#allocation3], 0
    %7 = vsyncpa [#allocation4], 0
    // Predicated region
    $region2: #{tpu_custom_call.1} parent=1 // pred_check
      _
    $region3: #{tpu_custom_call.1} parent=1 // pred_check_branch
      %9 = sbr.rel (0) target = $region5
    $region4: #{tpu_custom_call.1} parent=1 // pred_region
      %11 = vsyncadd [#allocation3], 0
      %s12 = sshll.u32 %s0, 4
      %s13 = int_to_ptr.hbm [resolvable:$true] %s12
      %s14 = sshll.u32 [#allocation2], 4
      %s15 = int_to_ptr.vmem [resolvable:$true] %s14
      %20 = dma.hbm_to_vmem [thread:$0]  %s13, 256, %s15, [#allocation3], 128, 128, 8
    $region5: #{tpu_custom_call.1} parent=1 // pred_fallthru
      _
    // Predicated region
    $region6: #{tpu_custom_call.1} parent=1 // pred_check
      _
    $region7: #{tpu_custom_call.1} parent=1 // pred_check_branch
      %22 = sbr.rel (0) target = $region9
    $region8: #{tpu_custom_call.1} parent=1 // pred_region
      %24 = dma.done [#allocation3], 256
    $region9: #{tpu_custom_call.1} parent=1 // pred_fallthru
      _
    %p25 = scmp.eq.s32.totalorder 0, 0
    // Predicated region
    $region10: #{tpu_custom_call.1} parent=1 // pred_check
      %p26 = pneg %p25
    $region11: #{tpu_custom_call.1} parent=1 // pred_check_branch
      %28 = sbr.rel (%p26) target = $region13
    $region12: #{tpu_custom_call.1} parent=1 // pred_region
      %vm29 = vcmask 0
      %30 = vst.msk [vmem:[#allocation5] sm:$0x1] %vm29, 0.0
    $region13: #{tpu_custom_call.1} parent=1 // pred_fallthru
      _
    %v31 = vld [vmem:[#allocation2] sm:$0xff]
    %v32 = vld [vmem:[#allocation2 + $0x8] sm:$0xff]
    %s33 = smul.u32 0, 16
    %v34 = vlaneseq
    %v35 = vshrl.u32 %v34, 7
    %v36 = vadd.s32 %v35, 8
    %v37 = vstv %s33
    %v38 = vadd.s32 %v37, %v35
    %v39 = vadd.s32 %v37, %v36
    %vm40 = vcmp.lt.s32.totalorder %v38, 16
    %vm41 = vcmp.lt.s32.totalorder %v39, 16
    %v42 = vsel %vm40, 1, 0
    %v43 = vsel %vm41, 1, 0
    %vm44 = vcmp.eq.s32.totalorder %v42, 1
    %vm45 = vcmp.eq.s32.totalorder %v43, 1
    %v46 = vsel %vm44, %v31, 0.0
    %v47 = vsel %vm45, %v32, 0.0
    %48 = vmax.xlane.f32.xlu0 %v46
    %v49 = vpop.xlane.xlu0 %48
    %50 = vmax.xlane.f32.xlu0 %v47
    %v51 = vpop.xlane.xlu0 %50
    %v52 = vsub.f32 %v46, %v49
    %v53 = vsub.f32 %v47, %v51
    %v54 = vmul.f32 %v52, 1.442695
    %v55 = vpow.pop %v54
    %v56 = vmul.f32 %v53, 1.442695
    %v57 = vpow.pop %v56
    %58 = vadd.xlane.f32.xlu0 %v55
    %v59 = vpop.xlane.xlu0 %58
    %60 = vadd.xlane.f32.xlu0 %v57
    %v61 = vpop.xlane.xlu0 %60
    %v62 = vlog2.pop %v59
    %v63 = vmul.f32 %v62, 0.6931472
    %v64 = vlog2.pop %v61
    %v65 = vmul.f32 %v64, 0.6931472
    %v66 = vmul.f32 %v55, %v52
    %v67 = vmul.f32 %v57, %v53
    %68 = vadd.xlane.f32.xlu0 %v66
    %v69 = vpop.xlane.xlu0 %68
    %70 = vadd.xlane.f32.xlu0 %v67
    %v71 = vpop.xlane.xlu0 %70
    %v72 = vrcp.pop %v59
    %v73 = vmul.f32 %v59, %v72
    %v74 = vsub.f32 1.0, %v73
    %v75 = vmul.f32 %v72, %v74
    %v76 = vadd.f32 %v72, %v75
    %vm77 = vweird.f32 %v59
    %vm78 = vweird.f32 %v72
    %vm79 = vmor %vm77, %vm78
    %v80 = vsel %vm79, %v72, %v76
    %v81 = vand.u32 2147483647, %v59
    %vm82 = vcmp.eq.f32.partialorder %v81, 8.507059e+37
    %v83 = vand.u32 %v59, 2147483648
    %v84 = vor.u32 1.1754944e-38, %v83
    %v85 = vsel %vm82, %v84, %v80
    %v86 = vmul.f32 %v69, %v85
    %v87 = vrcp.pop %v61
    %v88 = vmul.f32 %v61, %v87
    %v89 = vsub.f32 1.0, %v88
    %v90 = vmul.f32 %v87, %v89
    %v91 = vadd.f32 %v87, %v90
    %vm92 = vweird.f32 %v61
    %vm93 = vweird.f32 %v87
    %vm94 = vmor %vm92, %vm93
    %v95 = vsel %vm94, %v87, %v91
    %v96 = vand.u32 2147483647, %v61
    %vm97 = vcmp.eq.f32.partialorder %v96, 8.507059e+37
    %v98 = vand.u32 %v61, 2147483648
    %v99 = vor.u32 1.1754944e-38, %v98
    %v100 = vsel %vm97, %v99, %v95
    %v101 = vmul.f32 %v71, %v100
    %v102 = vsub.f32 %v63, %v86
    %v103 = vsub.f32 %v65, %v101
    %v104 = vsel %vm40, %v102, 0.0
    %v105 = vsel %vm41, %v103, 0.0
    %v106 = vld [vmem:[#allocation5] sm:$0x1]
    %vm107 = vcmask 7168
    %v108 = vsel %vm107, %v104, 0.0
    %v109 = vsel %vm107, %v105, 0.0
    %v110 = vadd.f32 %v108, %v109
    %111 = vadd.xlane.f32.xlu0 %v110
    %v112 = vpop.xlane.xlu0 %111
    %v113 = vrot.slane %v112, 4
    %v114 = vadd.f32 %v112, %v113
    %v115 = vrot.slane %v114, 2
    %v116 = vadd.f32 %v114, %v115
    %v117 = vrot.slane %v116, 1
    %v118 = vadd.f32 %v116, %v117
    %s119 = vtos %v118
    %v120 = vstv %s119
    %v121 = vadd.f32 %v106, %v120
    %vm122 = vcmask 0
    %123 = vst.msk [vmem:[#allocation5] sm:$0x1] %vm122, %v121
    // Predicated region
    $region14: #{tpu_custom_call.1} parent=1 // pred_check
      _
    $region15: #{tpu_custom_call.1} parent=1 // pred_check_branch
      %125 = sbr.rel (0) target = $region17
    $region16: #{tpu_custom_call.1} parent=1 // pred_region
      %127 = vsyncadd [#allocation4], 0
      %s129 = sshll.u32 [#allocation5], 4
      %s130 = int_to_ptr.vmem [resolvable:$true] %s129
      %s131 = sshll.u32 %s1, 4
      %s132 = int_to_ptr.hbm [resolvable:$true] %s131
      %134 = dma.vmem_to_hbm [thread:$0]  %s130, 16, %s132, [#allocation4]
    $region17: #{tpu_custom_call.1} parent=1 // pred_fallthru
      _
    // Predicated region
    $region18: #{tpu_custom_call.1} parent=1 // pred_check
      _
    $region19: #{tpu_custom_call.1} parent=1 // pred_check_branch
      %136 = sbr.rel (0) target = $region21
    $region20: #{tpu_custom_call.1} parent=1 // pred_region
      %138 = dma.done [#allocation4], 16
    $region21: #{tpu_custom_call.1} parent=1 // pred_fallthru
      _
    %139 = vsyncpa [#allocation3], 1
    %140 = vsyncpa [#allocation4], 1

</llo_original>
